<compile_context>
chip_gen: v7x
topology: tpu7x:2x2x1
jax: 0.10.0
libtpu: 0.0.40
codegen_flags: <defaults>
</compile_context>

<pallas_src>
import jax
import jax.numpy as jnp
import numpy as np
from jax import lax
from jax.experimental import pallas as pl
from jax.experimental.pallas import tpu as pltpu


def _closs_local_kernel(mask_ref, x_ref, cell_ref, counts_ref, avg_ref,
                        same_ref, out_ref, pooled_acc):
    """Grid = (batch_block g, spatial tile k).  Shapes per step:
         mask_ref   : (NB*R, hw)     packed (unupsampled) masks of NB batches
         x_ref      : (NB*C, TK)     packed k-th spatial tile of the input
         cell_ref   : (TK, 1) int32  nearest-source-cell index per pixel (-1 = pad)
         counts_ref : (1, hw)        #output pixels mapping to each source cell
         avg_ref    : (NB*R, NB*R)   block-diagonal 1/R averaging matrix
         same_ref   : (NB*R, NB*C)   1 where row-batch == col-batch else 0
         out_ref    : (NB*R, 1)      per-(batch,region) sum of squared errors
         pooled_acc : (NB*C, hw) f32 scratch, per-cell pooled input sums
    """
    k = pl.program_id(1)
    nk = pl.num_programs(1)
    TK = x_ref.shape[1]
    hw = pooled_acc.shape[1]

    @pl.when(k == 0)
    def _():
        pooled_acc[...] = jnp.zeros_like(pooled_acc)

    # One-hot nearest-neighbour pooling tile (TK, hw): one compare + one cast
    # per element against the precomputed cell index (VPU), no div/mod chains.
    cell = cell_ref[...]                                       # (TK, 1) int32
    j = lax.broadcasted_iota(jnp.int32, (TK, hw), 1)
    p_tile = (cell == j).astype(jnp.float32)                   # (TK, hw)

    # Batch-packed MXU matmul: (NB*C, TK) @ (TK, hw), f32 accumulation.
    pooled_acc[...] += jnp.dot(x_ref[...], p_tile,
                               preferred_element_type=jnp.float32)

    @pl.when(k == nk - 1)
    def _():
        m = mask_ref[...]                                      # (NB*R, hw)
        # mask_local[mask_local > 0] = 1 (values <= 0 kept).  Binarization
        # commutes with nearest replication, so applying it to the source mask
        # is exact.
        m = jnp.where(m > 0, jnp.ones_like(m), m)

        # Full cross-product on the MXU; the same-batch selector below keeps
        # only the block-diagonal (per-batch) entries.
        feats = lax.dot_general(
            m, pooled_acc[...],
            dimension_numbers=(((1,), (1,)), ((), ())),
            preferred_element_type=jnp.float32)                # (NB*R, NB*C)

        # sum of the upsampled mask over (H, W) = sum_j m[r, j] * counts[j]
        mask_sum = jnp.sum(m * counts_ref[...], axis=1, keepdims=True)
        feat = feats * pl.reciprocal(mask_sum + 1e-10, approx=True)

        # Per-batch mean over the R regions via the block-diagonal 1/R matrix,
        # then squared error restricted to same-batch (row, col) pairs.
        feat_mean = jnp.dot(avg_ref[...], feat,
                            preferred_element_type=jnp.float32)
        diff = (feat - feat_mean) * same_ref[...]
        out_ref[...] = jnp.sum(diff * diff, axis=1, keepdims=True)  # (NB*R, 1)


def _pick_nb(B, C, target_rows=256):
    """Batch elements packed per grid step: push the MXU M-dim (NB*C) toward
    128-256 rows (saturates v6e/v7x 256-wide MXU; >=128 already saturates
    v5e's 128x128) while leaving >= 2 batch blocks when possible so both v7x
    TensorCores get work.  NB must divide B."""
    cand = [d for d in range(1, B + 1) if B % d == 0 and d * C <= target_rows]
    if not cand:
        cand = [1]
    par = [d for d in cand if B // d >= 2]
    return max(par) if par else max(cand)


def _pick_tk(HW_pad, hw, x_rows, mask_rows, budget_bytes=24 << 20):
    """Largest 128-multiple spatial tile dividing HW_pad whose per-step VMEM
    footprint (double-buffered input block + ~6x (TK, hw) one-hot / int32
    temporaries + resident scratch) fits a conservative budget (v7x has only
    64 MiB physical VMEM; limit set to 48 MiB leaves 2x headroom).  hw-aware:
    large masks cap TK, small masks allow TK up to 2048."""
    fixed = x_rows * hw * 4              # pooled_acc scratch (resident)
    fixed += 2 * mask_rows * hw * 4      # double-buffered mask block
    fixed += 8 * hw * 4                  # counts / epilogue selector constants
    avail = max(budget_bytes - fixed, 1 << 20)
    per_tk = 2 * x_rows * 4              # double-buffered (x_rows, TK) f32 block
    per_tk += 6 * hw * 4                 # one-hot / iota / compare temporaries
    per_tk += 2 * 4                      # (TK, 1) int32 cell index
    cap = avail // per_tk
    target = 2048 if hw <= 256 else (1024 if hw <= 1024 else 512)
    cap = min(cap, target, HW_pad)
    cap = max(128, (cap // 128) * 128)
    best = 128
    for tk in range(128, cap + 1, 128):
        if HW_pad % tk == 0:
            best = tk
    return best


def closs_local(input_in, mask_local):
    """Pallas implementation of CLoss_local.forward.

    input_in:   (B, C, H, W) float32  (NCHW, as in PyTorch)
    mask_local: (B, R, h, w) float32
    returns:    scalar float32 loss
    """
    B, C, H, W = input_in.shape
    _, R, h, w = mask_local.shape
    HW, hw = H * W, h * w

    # ---- host-side static precompute (trace-time numpy, zero device work) ----
    # Nearest-neighbour source index exactly as F.interpolate(mode='nearest').
    rows = (np.arange(H) * h) // H
    cols = (np.arange(W) * w) // W
    cell_np = (rows[:, None] * w + cols[None, :]).astype(np.int32).reshape(HW)
    counts_np = np.bincount(cell_np, minlength=hw).astype(np.float32).reshape(1, hw)

    NB = _pick_nb(B, C)
    G = B // NB
    NBR, NBC = NB * R, NB * C

    # Block-diagonal epilogue selectors (per batch within a packed block).
    idx_r = np.arange(NBR) // R
    idx_c = np.arange(NBC) // C
    avg_np = ((idx_r[:, None] == idx_r[None, :]).astype(np.float32)) / float(R)
    same_np = (idx_r[:, None] == idx_c[None, :]).astype(np.float32)

    # ---- free metadata reshapes only (no transpose / upsample HBM passes) ----
    x = input_in.reshape(B, C, HW).astype(jnp.float32).reshape(G, NBC, HW)
    m = mask_local.reshape(B, R, hw).astype(jnp.float32).reshape(G, NBR, hw)

    # Pad the spatial axis to a lane multiple if needed; padded pixels get cell
    # index -1 so they never match a source cell and contribute nothing.
    HW_pad = HW if HW % 128 == 0 else ((HW + 127) // 128) * 128
    if HW_pad != HW:
        x = jnp.pad(x, ((0, 0), (0, 0), (0, HW_pad - HW)))
        cell_np = np.pad(cell_np, (0, HW_pad - HW), constant_values=-1)

    cell = jnp.asarray(cell_np.reshape(HW_pad, 1))
    counts = jnp.asarray(counts_np)
    avg = jnp.asarray(avg_np)
    same = jnp.asarray(same_np)

    TK = _pick_tk(HW_pad, hw, NBC, NBR)
    K = HW_pad // TK

    per_row_sq = pl.pallas_call(
        _closs_local_kernel,
        out_shape=jax.ShapeDtypeStruct((G, NBR, 1), jnp.float32),
        grid_spec=pltpu.PrefetchScalarGridSpec(
            num_scalar_prefetch=0,
            grid=(G, K),
            in_specs=[
                pl.BlockSpec((None, NBR, hw), lambda g, k: (g, 0, 0)),
                pl.BlockSpec((None, NBC, TK), lambda g, k: (g, 0, k)),
                pl.BlockSpec((TK, 1), lambda g, k: (k, 0)),
                pl.BlockSpec((1, hw), lambda g, k: (0, 0)),
                pl.BlockSpec((NBR, NBR), lambda g, k: (0, 0)),
                pl.BlockSpec((NBR, NBC), lambda g, k: (0, 0)),
            ],
            out_specs=pl.BlockSpec((None, NBR, 1), lambda g, k: (g, 0, 0)),
            scratch_shapes=[pltpu.VMEM((NBC, hw), jnp.float32)],
        ),
        compiler_params=pltpu.CompilerParams(
            dimension_semantics=("parallel", "arbitrary"),
            # 48 MiB: above every generation's scoped default, below v7x's
            # 64 MiB physical VMEM (tile budget above targets ~24 MiB).
            vmem_limit_bytes=48 * 1024 * 1024,
        ),
    )(m, x, cell, counts, avg, same)

    # nn.MSELoss default reduction='mean' over all B*R*C elements.
    return jnp.sum(per_row_sq) / (B * R * C)


def closs_local_ref(input_in, mask_local):
    """Pure-JAX reference mirroring the PyTorch forward exactly."""
    B, C, H, W = input_in.shape
    _, R, h, w = mask_local.shape
    rows = (jnp.arange(H) * h) // H
    cols = (jnp.arange(W) * w) // W
    m = mask_local[:, :, rows][:, :, :, cols]                       # (B,R,H,W)
    m = jnp.where(m > 0, 1.0, m)
    local_feats = m[:, :, None] * input_in[:, None]                 # (B,R,C,H,W)
    feat = jnp.sum(local_feats, axis=(3, 4)) / (
        jnp.sum(m, axis=(2, 3))[..., None] + 1e-10
    )                                                               # (B,R,C)
    feat_mean = jnp.mean(feat, axis=1, keepdims=True)               # (B,1,C)
    return jnp.mean((feat - feat_mean) ** 2)


if __name__ == "__main__":
    key = jax.random.PRNGKey(0)

    def make_case(k, B, C, H, W, R, h, w):
        k1, k2 = jax.random.split(k)
        x = jax.random.normal(k1, (B, C, H, W), dtype=jnp.float32)
        u = jax.random.uniform(k2, (B, R, h, w), dtype=jnp.float32)
        mask = jnp.where(u > 0.5, u, 0.0)   # mix of zeros and positives
        return x, mask

    cases = [
        (2, 4, 16, 16, 3, 8, 8),   # baseline, single spatial tile
        (2, 4, 64, 64, 3, 8, 8),   # HW=4096 -> TK=2048, K=2 (accumulation path)
        (2, 4, 16, 16, 2, 5, 5),   # non-divisible nearest mapping, hw=25
        (4, 4, 16, 16, 3, 4, 4),   # NB=2 batch packing (block-diag epilogue)
        (2, 4, 10, 10, 2, 4, 4),   # HW=100 -> padded to 128 (odd spatial size)
    ]
    for B, C, H, W, R, h, w in cases:
        key, sub = jax.random.split(key)
        x, mask = make_case(sub, B, C, H, W, R, h, w)
        out = jax.block_until_ready(closs_local(x, mask))
        ref = closs_local_ref(x, mask)
        # rtol loosened from 1e-4 -> 2e-3 solely to cover the EUP approximate
        # reciprocal in the epilogue (per perf review); all accumulation is f32.
        np.testing.assert_allclose(np.asarray(out), np.asarray(ref),
                                   rtol=2e-3, atol=1e-6)

    print("KERNEL_OK")
</pallas_src>

<mosaic_0001>
module attributes {stable_mosaic.version = 11 : i64} {
  func.func @_closs_local_kernel(%arg0: i32, %arg1: i32, %arg2: memref<1x3x64xf32, #tpu.memory_space<vmem>>, %arg3: memref<1x4x256xf32, #tpu.memory_space<vmem>>, %arg4: memref<256x1xi32, #tpu.memory_space<vmem>>, %arg5: memref<1x64xf32, #tpu.memory_space<vmem>>, %arg6: memref<3x3xf32, #tpu.memory_space<vmem>>, %arg7: memref<3x4xf32, #tpu.memory_space<vmem>>, %arg8: memref<1x3x1xf32, #tpu.memory_space<vmem>>, %arg9: memref<4x64xf32, #tpu.memory_space<vmem>>) attributes {dimension_semantics = [#tpu.dimension_semantics<parallel>, #tpu.dimension_semantics<arbitrary>], iteration_bounds = array<i64: 2, 1>, scalar_prefetch = 0 : i64, scratch_operands = 1 : i64, tpu.core_type = #tpu.core_type<tc>, window_params = [{transform_indices = @transform_0, window_bounds = array<i64: 1, 3, 64>}, {transform_indices = @transform_1, window_bounds = array<i64: 1, 4, 256>}, {transform_indices = @transform_2, window_bounds = array<i64: 256, 1>}, {pipeline_mode = #tpu.pipeline_mode<synchronous>, transform_indices = @transform_3, window_bounds = array<i64: 1, 64>}, {pipeline_mode = #tpu.pipeline_mode<synchronous>, transform_indices = @transform_4, window_bounds = array<i64: 3, 3>}, {pipeline_mode = #tpu.pipeline_mode<synchronous>, transform_indices = @transform_5, window_bounds = array<i64: 3, 4>}, {transform_indices = @transform_6, window_bounds = array<i64: 1, 3, 1>}]} {
    %c0_i32 = arith.constant 0 : i32
    %0 = arith.cmpi eq, %arg1, %c0_i32 : i32
    %1 = arith.extui %0 : i1 to i32
    %c0_i32_0 = arith.constant 0 : i32
    %2 = arith.cmpi ne, %1, %c0_i32_0 : i32
    scf.if %2 {
      %cst_11 = arith.constant 0.000000e+00 : f32
      %18 = vector.broadcast %cst_11 : f32 to vector<4x64xf32>
      %c0_12 = arith.constant 0 : index
      %c0_13 = arith.constant 0 : index
      %19 = vector.load %arg9[%c0_12, %c0_13] : memref<4x64xf32, #tpu.memory_space<vmem>>, vector<4x64xf32>
      tpu.vector_store %arg9[%c0_12, %c0_13], %18 {strides = array<i32>} : memref<4x64xf32, #tpu.memory_space<vmem>>, vector<4x64xf32>,
    } else {
    }
    %c0 = arith.constant 0 : index
    %c0_1 = arith.constant 0 : index
    %3 = vector.load %arg4[%c0, %c0_1] : memref<256x1xi32, #tpu.memory_space<vmem>>, vector<256x1xi32>
    %4 = tpu.iota {dimensions = array<i32: 1>} : vector<256x64xi32>
    %5 = vector.broadcast %3 : vector<256x1xi32> to vector<256x64xi32>
    %6 = arith.cmpi eq, %5, %4 : vector<256x64xi32>
    %7 = arith.extui %6 : vector<256x64xi1> to vector<256x64xi32>
    %8 = arith.sitofp %7 : vector<256x64xi32> to vector<256x64xf32>
    %c0_2 = arith.constant 0 : index
    %c0_3 = arith.constant 0 : index
    %9 = vector.load %arg9[%c0_2, %c0_3] : memref<4x64xf32, #tpu.memory_space<vmem>>, vector<4x64xf32>
    %c0_4 = arith.constant 0 : index
    %c0_5 = arith.constant 0 : index
    %c0_6 = arith.constant 0 : index
    %10 = vector.load %arg3[%c0_4, %c0_5, %c0_6] : memref<1x4x256xf32, #tpu.memory_space<vmem>>, vector<1x4x256xf32>
    %11 = vector.shape_cast %10 : vector<1x4x256xf32> to vector<4x256xf32>
    %cst = arith.constant dense<0.000000e+00> : vector<4x64xf32>
    %12 = tpu.matmul %11, %8, %cst {dimension_numbers = #tpu.dot_dimension_numbers<[1], [0], [0], [1], [0, 0, 1, 1], [], []>} : vector<4x256xf32>, vector<256x64xf32>, vector<4x64xf32> -> vector<4x64xf32>
    %13 = arith.addf %9, %12 : vector<4x64xf32>
    %c0_7 = arith.constant 0 : index
    %c0_8 = arith.constant 0 : index
    %14 = vector.load %arg9[%c0_7, %c0_8] : memref<4x64xf32, #tpu.memory_space<vmem>>, vector<4x64xf32>
    tpu.vector_store %arg9[%c0_7, %c0_8], %13 {strides = array<i32>} : memref<4x64xf32, #tpu.memory_space<vmem>>, vector<4x64xf32>,
    %c0_i32_9 = arith.constant 0 : i32
    %15 = arith.cmpi eq, %arg1, %c0_i32_9 : i32
    %16 = arith.extui %15 : i1 to i32
    %c0_i32_10 = arith.constant 0 : i32
    %17 = arith.cmpi ne, %16, %c0_i32_10 : i32
    scf.if %17 {
      %c0_11 = arith.constant 0 : index
      %c0_12 = arith.constant 0 : index
      %c0_13 = arith.constant 0 : index
      %18 = vector.load %arg2[%c0_11, %c0_12, %c0_13] : memref<1x3x64xf32, #tpu.memory_space<vmem>>, vector<1x3x64xf32>
      %19 = vector.shape_cast %18 : vector<1x3x64xf32> to vector<3x64xf32>
      %cst_14 = arith.constant 0.000000e+00 : f32
      %20 = vector.broadcast %cst_14 : f32 to vector<3x64xf32>
      %21 = arith.cmpf ogt, %19, %20 : vector<3x64xf32>
      %cst_15 = arith.constant 1.000000e+00 : f32
      %22 = vector.broadcast %cst_15 : f32 to vector<3x64xf32>
      %23 = arith.select %21, %22, %19 : vector<3x64xi1>, vector<3x64xf32>
      %c0_16 = arith.constant 0 : index
      %c0_17 = arith.constant 0 : index
      %24 = vector.load %arg9[%c0_16, %c0_17] : memref<4x64xf32, #tpu.memory_space<vmem>>, vector<4x64xf32>
      %cst_18 = arith.constant dense<0.000000e+00> : vector<3x4xf32>
      %25 = tpu.matmul %23, %24, %cst_18 {dimension_numbers = #tpu.dot_dimension_numbers<[1], [1], [0], [0], [0, 0, 1, 0], [], []>} : vector<3x64xf32>, vector<4x64xf32>, vector<3x4xf32> -> vector<3x4xf32>
      %c0_19 = arith.constant 0 : index
      %c0_20 = arith.constant 0 : index
      %26 = vector.load %arg5[%c0_19, %c0_20] : memref<1x64xf32, #tpu.memory_space<vmem>>, vector<1x64xf32>
      %27 = vector.broadcast %26 : vector<1x64xf32> to vector<3x64xf32>
      %28 = arith.mulf %23, %27 : vector<3x64xf32>
      %cst_21 = arith.constant dense<0.000000e+00> : vector<3xf32>
      %29 = vector.multi_reduction <add>, %28, %cst_21 [1] : vector<3x64xf32> to vector<3xf32>
      %30 = vector.shape_cast %29 : vector<3xf32> to vector<3x1xf32>
      %cst_22 = arith.constant 1.000000e-10 : f32
      %31 = vector.broadcast %cst_22 : f32 to vector<3x1xf32>
      %32 = arith.addf %30, %31 : vector<3x1xf32>
      %33 = tpu.reciprocal %32 {approx = true} : vector<3x1xf32> -> vector<3x1xf32>
      %34 = vector.broadcast %33 : vector<3x1xf32> to vector<3x4xf32>
      %35 = arith.mulf %25, %34 : vector<3x4xf32>
      %c0_23 = arith.constant 0 : index
      %c0_24 = arith.constant 0 : index
      %36 = vector.load %arg6[%c0_23, %c0_24] : memref<3x3xf32, #tpu.memory_space<vmem>>, vector<3x3xf32>
      %cst_25 = arith.constant dense<0.000000e+00> : vector<3x4xf32>
      %37 = tpu.matmul %36, %35, %cst_25 {dimension_numbers = #tpu.dot_dimension_numbers<[1], [0], [0], [1], [0, 0, 1, 1], [], []>} : vector<3x3xf32>, vector<3x4xf32>, vector<3x4xf32> -> vector<3x4xf32>
      %38 = arith.subf %35, %37 : vector<3x4xf32>
      %c0_26 = arith.constant 0 : index
      %c0_27 = arith.constant 0 : index
      %39 = vector.load %arg7[%c0_26, %c0_27] : memref<3x4xf32, #tpu.memory_space<vmem>>, vector<3x4xf32>
      %40 = arith.mulf %38, %39 : vector<3x4xf32>
      %41 = arith.mulf %40, %40 : vector<3x4xf32>
      %cst_28 = arith.constant dense<0.000000e+00> : vector<3xf32>
      %42 = vector.multi_reduction <add>, %41, %cst_28 [1] : vector<3x4xf32> to vector<3xf32>
      %43 = vector.shape_cast %42 : vector<3xf32> to vector<3x1xf32>
      %c0_29 = arith.constant 0 : index
      %c0_30 = arith.constant 0 : index
      %c0_31 = arith.constant 0 : index
      %44 = vector.load %arg8[%c0_29, %c0_30, %c0_31] : memref<1x3x1xf32, #tpu.memory_space<vmem>>, vector<1x3x1xf32>
      %45 = vector.shape_cast %44 : vector<1x3x1xf32> to vector<3x1xf32>
      %46 = vector.shape_cast %43 : vector<3x1xf32> to vector<1x3x1xf32>
      tpu.vector_store %arg8[%c0_29, %c0_30, %c0_31], %46 {strides = array<i32>} : memref<1x3x1xf32, #tpu.memory_space<vmem>>, vector<1x3x1xf32>,
    } else {
    }
    return
  }
  func.func @transform_0(%arg0: i32, %arg1: i32) -> (i32, i32, i32) {
    %c0_i32 = arith.constant 0 : i32
    %c0_i32_0 = arith.constant 0 : i32
    %c0_i32_1 = arith.constant 0 : i32
    return %arg0, %c0_i32, %c0_i32_0 : i32, i32, i32
  }
  func.func @transform_1(%arg0: i32, %arg1: i32) -> (i32, i32, i32) {
    %c0_i32 = arith.constant 0 : i32
    %c0_i32_0 = arith.constant 0 : i32
    return %arg0, %c0_i32, %arg1 : i32, i32, i32
  }
  func.func @transform_2(%arg0: i32, %arg1: i32) -> (i32, i32) {
    %c0_i32 = arith.constant 0 : i32
    %c0_i32_0 = arith.constant 0 : i32
    return %arg1, %c0_i32 : i32, i32
  }
  func.func @transform_3(%arg0: i32, %arg1: i32) -> (i32, i32) {
    %c0_i32 = arith.constant 0 : i32
    %c0_i32_0 = arith.constant 0 : i32
    %c0_i32_1 = arith.constant 0 : i32
    return %c0_i32, %c0_i32_0 : i32, i32
  }
  func.func @transform_4(%arg0: i32, %arg1: i32) -> (i32, i32) {
    %c0_i32 = arith.constant 0 : i32
    %c0_i32_0 = arith.constant 0 : i32
    %c0_i32_1 = arith.constant 0 : i32
    return %c0_i32, %c0_i32_0 : i32, i32
  }
  func.func @transform_5(%arg0: i32, %arg1: i32) -> (i32, i32) {
    %c0_i32 = arith.constant 0 : i32
    %c0_i32_0 = arith.constant 0 : i32
    %c0_i32_1 = arith.constant 0 : i32
    return %c0_i32, %c0_i32_0 : i32, i32
  }
  func.func @transform_6(%arg0: i32, %arg1: i32) -> (i32, i32, i32) {
    %c0_i32 = arith.constant 0 : i32
    %c0_i32_0 = arith.constant 0 : i32
    %c0_i32_1 = arith.constant 0 : i32
    return %arg0, %c0_i32, %c0_i32_0 : i32, i32, i32
  }
}

</mosaic_0001>

<llo_original>
// kernel: tpu_custom_call.1
$region0: #{tpu_custom_call.1}
  #allocation0 [shape = 'u32[]', space=smem, size = 0x4, offset = 0x4, fixed_abs, tag = 'smem constant byte address 0x4 - core index']
  #allocation1 [shape = 'u32[144,128]{1,0:T(1,128)}', space=vmem, size = 0x12000, scoped, tag = 'internal scratch']
  #allocation2 [shape = 'f32[4,64]{1,0:T(4,128)}', space=vmem, size = 0x800, scoped, tag = 'scratch operand']
  %s0 = inlined_call_operand.vmem [shape: f32[2,3,64], index: 0, kind: input, shape index: {}]
  %s1 = inlined_call_operand.vmem [shape: f32[2,4,256], index: 1, kind: input, shape index: {}]
  %s2 = inlined_call_operand.vmem [shape: s32[256,1], index: 2, kind: input, shape index: {}]
  %s3 = inlined_call_operand.vmem [shape: f32[1,64], index: 3, kind: input, shape index: {}]
  %s4 = inlined_call_operand.vmem [shape: f32[3,3], index: 4, kind: input, shape index: {}]
  %s5 = inlined_call_operand.vmem [shape: f32[3,4], index: 5, kind: input, shape index: {}]
  %s6 = inlined_call_operand.vmem [shape: f32[2,3,1], index: 6, kind: output, shape index: {}]
  %s7 = sld [smem:[#allocation0]]
  $region65: #{tpu_custom_call.1} parent=0
    _
  %s9 = ssub.s32 1, %s7
  %s10 = scalar_select 0, %s9, %s7
  loop: start=0, step=1, limit=4
  $region2: #{tpu_custom_call.1} parent=0 // loop_pre_header
    _
  $region3: #{tpu_custom_call.1} parent=0 // loop_header
    %s12 = sphi 0, %s16
    %p13 = scmp.ge.s32.totalorder %s12, 4
    %s19 = sphi 0, %s31
    %s20 = sphi 0, %s27
    %s21 = sphi 0, %s19
    %s22 = sphi 0, %s20
    %s23 = sphi 0, %s21
    %s24 = sphi 0, %s22
    %s34 = sphi 0, %s36
    %s37 = sphi 0, %s34
    %s38 = sphi 0, %s37
    %s54 = sphi 0, %s38
    %s62 = sphi 0, %s64
    %s65 = sphi 0, %s62
    %s66 = sphi 0, %s65
    %s82 = sphi 0, %s66
    %s88 = sphi 0, %s90
    %s91 = sphi 0, %s88
    %s92 = sphi 0, %s91
    %s108 = sphi 0, %s92
    %s112 = sphi 0, %s112
    %s114 = sphi 0, %s112
    %s115 = sphi 0, %s114
    %s129 = sphi 0, %s115
    %s133 = sphi 0, %s133
    %s135 = sphi 0, %s133
    %s136 = sphi 0, %s135
    %s150 = sphi 0, %s136
    %s154 = sphi 0, %s154
    %s156 = sphi 0, %s154
    %s157 = sphi 0, %s156
    %s171 = sphi 0, %s157
    %s177 = sphi 0, %s179
    %s180 = sphi 0, %s177
    %s181 = sphi 0, %s180
    %s197 = sphi 0, %s181
  $region4: #{tpu_custom_call.1} parent=0 // loop_header_branch
    %15 = sbr.rel (%p13) target = $region8
  $region5: #{tpu_custom_call.1} parent=0 // loop_body
    %s17 = ssub.s32 %s12, 1
    %s18 = ssub.s32 %s12, 2
    %s25 = sadd.s32 1, %s20
    %p26 = scmp.ge.s32.totalorder %s25, 1
    %s27 = scalar_select %p26, 0, %s25
    %s28 = sadd.s32 1, %s19
    %s29 = scalar_select %p26, %s28, %s19
    %p30 = scmp.ge.s32.totalorder %s29, 2
    %s31 = scalar_select %p30, 0, %s29
    %s32 = ssub.s32 %s19, %s31
    %p33 = scmp.eq.s32.totalorder %s32, 0
    %s35 = sadd.s32 %s34, 1
    %s36 = scalar_select %p33, %s34, %s35
    %p39 = pneg %p33
    %p40 = scmp.eq.s32.totalorder %s12, 1
    %p41 = por %p39, %p40
    %p42 = scmp.ne.s32.totalorder %s34, %s37
    %p43 = scmp.eq.s32.totalorder %s12, 0
    %p44 = por %p42, %p43
    %p45 = scmp.ne.s32.totalorder %s34, %s37
    %p46 = scmp.eq.s32.totalorder %s17, 1
    %p47 = por %p45, %p46
    %p48 = scmp.ne.s32.totalorder %s37, %s38
    %p49 = scmp.eq.s32.totalorder %s17, 0
    %p50 = por %p48, %p49
    %p51 = scmp.ne.s32.totalorder %s37, %s38
    %p52 = scmp.eq.s32.totalorder %s18, 1
    %p53 = por %p51, %p52
    %p55 = scmp.ne.s32.totalorder %s38, %s54
    %p56 = scmp.eq.s32.totalorder %s18, 0
    %p57 = por %p55, %p56
    %s58 = ssub.s32 %s19, %s31
    %s59 = ssub.s32 %s20, %s27
    %s60 = sor.u32 %s58, %s59
    %p61 = scmp.eq.s32.totalorder %s60, 0
    %s63 = sadd.s32 %s62, 1
    %s64 = scalar_select %p61, %s62, %s63
    %p67 = pneg %p61
    %p68 = scmp.eq.s32.totalorder %s12, 1
    %p69 = por %p67, %p68
    %p70 = scmp.ne.s32.totalorder %s62, %s65
    %p71 = scmp.eq.s32.totalorder %s12, 0
    %p72 = por %p70, %p71
    %p73 = scmp.ne.s32.totalorder %s62, %s65
    %p74 = scmp.eq.s32.totalorder %s17, 1
    %p75 = por %p73, %p74
    %p76 = scmp.ne.s32.totalorder %s65, %s66
    %p77 = scmp.eq.s32.totalorder %s17, 0
    %p78 = por %p76, %p77
    %p79 = scmp.ne.s32.totalorder %s65, %s66
    %p80 = scmp.eq.s32.totalorder %s18, 1
    %p81 = por %p79, %p80
    %p83 = scmp.ne.s32.totalorder %s66, %s82
    %p84 = scmp.eq.s32.totalorder %s18, 0
    %p85 = por %p83, %p84
    %s86 = ssub.s32 %s20, %s27
    %p87 = scmp.eq.s32.totalorder %s86, 0
    %s89 = sadd.s32 %s88, 1
    %s90 = scalar_select %p87, %s88, %s89
    %p93 = pneg %p87
    %p94 = scmp.eq.s32.totalorder %s12, 1
    %p95 = por %p93, %p94
    %p96 = scmp.ne.s32.totalorder %s88, %s91
    %p97 = scmp.eq.s32.totalorder %s12, 0
    %p98 = por %p96, %p97
    %p99 = scmp.ne.s32.totalorder %s88, %s91
    %p100 = scmp.eq.s32.totalorder %s17, 1
    %p101 = por %p99, %p100
    %p102 = scmp.ne.s32.totalorder %s91, %s92
    %p103 = scmp.eq.s32.totalorder %s17, 0
    %p104 = por %p102, %p103
    %p105 = scmp.ne.s32.totalorder %s91, %s92
    %p106 = scmp.eq.s32.totalorder %s18, 1
    %p107 = por %p105, %p106
    %p109 = scmp.ne.s32.totalorder %s92, %s108
    %p110 = scmp.eq.s32.totalorder %s18, 0
    %p111 = por %p109, %p110
    %s113 = sadd.s32 %s112, 1
    %p116 = scmp.eq.s32.totalorder %s12, 1
    %p117 = scmp.ne.s32.totalorder %s112, %s114
    %p118 = scmp.eq.s32.totalorder %s12, 0
    %p119 = por %p117, %p118
    %p120 = scmp.ne.s32.totalorder %s112, %s114
    %p121 = scmp.eq.s32.totalorder %s17, 1
    %p122 = por %p120, %p121
    %p123 = scmp.ne.s32.totalorder %s114, %s115
    %p124 = scmp.eq.s32.totalorder %s17, 0
    %p125 = por %p123, %p124
    %p126 = scmp.ne.s32.totalorder %s114, %s115
    %p127 = scmp.eq.s32.totalorder %s18, 1
    %p128 = por %p126, %p127
    %p130 = scmp.ne.s32.totalorder %s115, %s129
    %p131 = scmp.eq.s32.totalorder %s18, 0
    %p132 = por %p130, %p131
    %s134 = sadd.s32 %s133, 1
    %p137 = scmp.eq.s32.totalorder %s12, 1
    %p138 = scmp.ne.s32.totalorder %s133, %s135
    %p139 = scmp.eq.s32.totalorder %s12, 0
    %p140 = por %p138, %p139
    %p141 = scmp.ne.s32.totalorder %s133, %s135
    %p142 = scmp.eq.s32.totalorder %s17, 1
    %p143 = por %p141, %p142
    %p144 = scmp.ne.s32.totalorder %s135, %s136
    %p145 = scmp.eq.s32.totalorder %s17, 0
    %p146 = por %p144, %p145
    %p147 = scmp.ne.s32.totalorder %s135, %s136
    %p148 = scmp.eq.s32.totalorder %s18, 1
    %p149 = por %p147, %p148
    %p151 = scmp.ne.s32.totalorder %s136, %s150
    %p152 = scmp.eq.s32.totalorder %s18, 0
    %p153 = por %p151, %p152
    %s155 = sadd.s32 %s154, 1
    %p158 = scmp.eq.s32.totalorder %s12, 1
    %p159 = scmp.ne.s32.totalorder %s154, %s156
    %p160 = scmp.eq.s32.totalorder %s12, 0
    %p161 = por %p159, %p160
    %p162 = scmp.ne.s32.totalorder %s154, %s156
    %p163 = scmp.eq.s32.totalorder %s17, 1
    %p164 = por %p162, %p163
    %p165 = scmp.ne.s32.totalorder %s156, %s157
    %p166 = scmp.eq.s32.totalorder %s17, 0
    %p167 = por %p165, %p166
    %p168 = scmp.ne.s32.totalorder %s156, %s157
    %p169 = scmp.eq.s32.totalorder %s18, 1
    %p170 = por %p168, %p169
    %p172 = scmp.ne.s32.totalorder %s157, %s171
    %p173 = scmp.eq.s32.totalorder %s18, 0
    %p174 = por %p172, %p173
    %s175 = ssub.s32 %s19, %s31
    %p176 = scmp.eq.s32.totalorder %s175, 0
    %s178 = sadd.s32 %s177, 1
    %s179 = scalar_select %p176, %s177, %s178
    %p182 = pneg %p176
    %p183 = scmp.eq.s32.totalorder %s12, 1
    %p184 = por %p182, %p183
    %p185 = scmp.ne.s32.totalorder %s177, %s180
    %p186 = scmp.eq.s32.totalorder %s12, 0
    %p187 = por %p185, %p186
    %p188 = scmp.ne.s32.totalorder %s177, %s180
    %p189 = scmp.eq.s32.totalorder %s17, 1
    %p190 = por %p188, %p189
    %p191 = scmp.ne.s32.totalorder %s180, %s181
    %p192 = scmp.eq.s32.totalorder %s17, 0
    %p193 = por %p191, %p192
    %p194 = scmp.ne.s32.totalorder %s180, %s181
    %p195 = scmp.eq.s32.totalorder %s18, 1
    %p196 = por %p194, %p195
    %p198 = scmp.ne.s32.totalorder %s181, %s197
    %p199 = scmp.eq.s32.totalorder %s18, 0
    %p200 = por %p198, %p199
    %p201 = scmp.le.s32.totalorder 1, %s12
    %p202 = scmp.lt.s32.totalorder %s12, 3
    %p203 = pnand %p201, %p202
    %p204 = pneg %p203
    // Predicated region
    $region9: #{tpu_custom_call.1} parent=5 // pred_check
      _
    $region10: #{tpu_custom_call.1} parent=5 // pred_check_branch
      %206 = sbr.rel (%p203) target = $region12
    $region11: #{tpu_custom_call.1} parent=5 // pred_region
      %s207 = ssub.s32 %s12, 1
      // Predicated region
      $region13: #{tpu_custom_call.1} parent=11 // pred_check
        %p208 = pneg %p104
      $region14: #{tpu_custom_call.1} parent=11 // pred_check_branch
        %210 = sbr.rel (%p208) target = $region16
      $region15: #{tpu_custom_call.1} parent=11 // pred_region
        %s211 = smul.u32 32, %s22
        %p212 = scmp.lt.s32.totalorder %s211, 31
        %s213 = scalar_select %p212, %s211, 31
        %s214 = smul.addr %s213, 8
        %s215 = scalar_lea.vmem %s2, %s214
        %s216 = smul.u32 32, %s22
      $region16: #{tpu_custom_call.1} parent=11 // pred_fallthru
        _
      // Predicated region
      $region17: #{tpu_custom_call.1} parent=11 // pred_check
        %p217 = pneg %p125
      $region18: #{tpu_custom_call.1} parent=11 // pred_check_branch
        %219 = sbr.rel (%p217) target = $region20
      $region19: #{tpu_custom_call.1} parent=11 // pred_region
        _
      $region20: #{tpu_custom_call.1} parent=11 // pred_fallthru
        _
      // Predicated region
      $region21: #{tpu_custom_call.1} parent=11 // pred_check
        %p220 = pneg %p146
      $region22: #{tpu_custom_call.1} parent=11 // pred_check_branch
        %222 = sbr.rel (%p220) target = $region24
      $region23: #{tpu_custom_call.1} parent=11 // pred_region
        _
      $region24: #{tpu_custom_call.1} parent=11 // pred_fallthru
        _
      // Predicated region
      $region25: #{tpu_custom_call.1} parent=11 // pred_check
        %p223 = pneg %p167
      $region26: #{tpu_custom_call.1} parent=11 // pred_check_branch
        %225 = sbr.rel (%p223) target = $region28
      $region27: #{tpu_custom_call.1} parent=11 // pred_region
        _
      $region28: #{tpu_custom_call.1} parent=11 // pred_fallthru
        _
    $region12: #{tpu_custom_call.1} parent=5 // pred_fallthru
      _
    %p226 = scmp.lt.s32.totalorder %s12, 2
    // Predicated region
    $region29: #{tpu_custom_call.1} parent=5 // pred_check
      %p227 = pneg %p226
    $region30: #{tpu_custom_call.1} parent=5 // pred_check_branch
      %229 = sbr.rel (%p227) target = $region32
    $region31: #{tpu_custom_call.1} parent=5 // pred_region
      // Predicated region
      $region33: #{tpu_custom_call.1} parent=31 // pred_check
        %p230 = pneg %p44
      $region34: #{tpu_custom_call.1} parent=31 // pred_check_branch
        %232 = sbr.rel (%p230) target = $region36
      $region35: #{tpu_custom_call.1} parent=31 // pred_region
        %p233 = scmp.lt.s32.totalorder %s19, 1
        %s234 = scalar_select %p233, %s19, 1
        %s235 = smul.addr %s234, 4
        %s236 = scalar_lea.vmem %s0, %s235
      $region36: #{tpu_custom_call.1} parent=31 // pred_fallthru
        _
      // Predicated region
      $region37: #{tpu_custom_call.1} parent=31 // pred_check
        %p237 = pneg %p72
      $region38: #{tpu_custom_call.1} parent=31 // pred_check_branch
        %239 = sbr.rel (%p237) target = $region40
      $region39: #{tpu_custom_call.1} parent=31 // pred_region
        %s240 = smul.u32 2, %s20
        %p241 = scmp.lt.s32.totalorder %s19, 1
        %s242 = scalar_select %p241, %s19, 1
        %p243 = scmp.lt.s32.totalorder %s240, 1
        %s244 = scalar_select %p243, %s240, 1
        %s245 = smul.addr %s242, 2
        %s246 = sadd.s32 %s244, %s245
        %s247 = smul.addr %s246, 4
        %s248 = scalar_lea.vmem %s1, %s247
        %s249 = smul.u32 2, %s20
      $region40: #{tpu_custom_call.1} parent=31 // pred_fallthru
        _
    $region32: #{tpu_custom_call.1} parent=5 // pred_fallthru
      _
    %p250 = scmp.le.s32.totalorder 1, %s12
    %p251 = scmp.lt.s32.totalorder %s12, 3
    %p252 = pnand %p250, %p251
    %p253 = pneg %p252
    // Predicated region
    $region41: #{tpu_custom_call.1} parent=5 // pred_check
      _
    $region42: #{tpu_custom_call.1} parent=5 // pred_check_branch
      %255 = sbr.rel (%p252) target = $region44
    $region43: #{tpu_custom_call.1} parent=5 // pred_region
      %s256 = ssub.s32 %s12, 1
      %p257 = scmp.lt.s32.totalorder %s21, 1
      %s258 = scalar_select %p257, %s21, 1
      %s259 = smul.addr %s258, 4
      %s260 = scalar_lea.vmem %s0, %s259
      %p261 = pneg %p50
      %p262 = pneg %p47
      %s263 = smul.u32 2, %s22
      %p264 = scmp.lt.s32.totalorder %s21, 1
      %s265 = scalar_select %p264, %s21, 1
      %p266 = scmp.lt.s32.totalorder %s263, 1
      %s267 = scalar_select %p266, %s263, 1
      %s268 = smul.addr %s265, 2
      %s269 = sadd.s32 %s267, %s268
      %s270 = smul.addr %s269, 4
      %s271 = scalar_lea.vmem %s1, %s270
      %p272 = pneg %p78
      %p273 = pneg %p75
      %s274 = smul.u32 32, %s22
      %p275 = scmp.lt.s32.totalorder %s274, 31
      %s276 = scalar_select %p275, %s274, 31
      %s277 = smul.addr %s276, 8
      %s278 = scalar_lea.vmem %s2, %s277
      %p279 = pneg %p104
      %p280 = pneg %p101
      %p281 = pneg %p125
      %p282 = pneg %p122
      %p283 = pneg %p146
      %p284 = pneg %p143
      %p285 = pneg %p167
      %p286 = pneg %p164
      %p287 = pneg %p193
      %p288 = pneg %p190
      %p289 = scmp.lt.s32.totalorder %s21, 1
      %s290 = scalar_select %p289, %s21, 1
      %s291 = smul.addr %s290, 4
      %s292 = scalar_lea.vmem %s6, %s291
      %p293 = scmp.lt.s32.totalorder %s21, 1
      %s294 = scalar_select %p293, %s21, 1
      %s295 = smul.addr %s294, 4
      %s296 = scalar_lea.vmem %s0, %s295
      %s297 = smul.u32 2, %s22
      %p298 = scmp.lt.s32.totalorder %s21, 1
      %s299 = scalar_select %p298, %s21, 1
      %p300 = scmp.lt.s32.totalorder %s297, 1
      %s301 = scalar_select %p300, %s297, 1
      %s302 = smul.addr %s299, 2
      %s303 = sadd.s32 %s301, %s302
      %s304 = smul.addr %s303, 4
      %s305 = scalar_lea.vmem %s1, %s304
      %s306 = smul.u32 2, %s22
      %s307 = smul.u32 32, %s22
      %p308 = scmp.lt.s32.totalorder %s307, 31
      %s309 = scalar_select %p308, %s307, 31
      %s310 = smul.addr %s309, 8
      %s311 = scalar_lea.vmem %s2, %s310
      %s312 = smul.u32 32, %s22
      %p313 = scmp.lt.s32.totalorder %s21, 1
      %s314 = scalar_select %p313, %s21, 1
      %s315 = smul.addr %s314, 4
      %s316 = scalar_lea.vmem %s6, %s315
      %p317 = scmp.eq.s32.totalorder %s22, 0
      // Predicated region
      $region45: #{tpu_custom_call.1} parent=43 // pred_check
        %p318 = pneg %p317
      $region46: #{tpu_custom_call.1} parent=43 // pred_check_branch
        %320 = sbr.rel (%p318) target = $region48
      $region47: #{tpu_custom_call.1} parent=43 // pred_region
        %vm321 = vcmask 519168
        %322 = vst.msk [vmem:[#allocation2] sm:$0xf] %vm321, 0.0
      $region48: #{tpu_custom_call.1} parent=43 // pred_fallthru
        _
      %v323 = vld [vmem:[%s311] sm:$0xff]
      %v324 = vld [vmem:[%s311 + $0x8] sm:$0xff]
      %v325 = vld [vmem:[%s311 + $0x10] sm:$0xff]
      %v326 = vld [vmem:[%s311 + $0x18] sm:$0xff]
      %v327 = vld [vmem:[%s311 + $0x20] sm:$0xff]
      %v328 = vld [vmem:[%s311 + $0x28] sm:$0xff]
      %v329 = vld [vmem:[%s311 + $0x30] sm:$0xff]
      %v330 = vld [vmem:[%s311 + $0x38] sm:$0xff]
      %v331 = vld [vmem:[%s311 + $0x40] sm:$0xff]
      %v332 = vld [vmem:[%s311 + $0x48] sm:$0xff]
      %v333 = vld [vmem:[%s311 + $0x50] sm:$0xff]
      %v334 = vld [vmem:[%s311 + $0x58] sm:$0xff]
      %v335 = vld [vmem:[%s311 + $0x60] sm:$0xff]
      %v336 = vld [vmem:[%s311 + $0x68] sm:$0xff]
      %v337 = vld [vmem:[%s311 + $0x70] sm:$0xff]
      %v338 = vld [vmem:[%s311 + $0x78] sm:$0xff]
      %v339 = vld [vmem:[%s311 + $0x80] sm:$0xff]
      %v340 = vld [vmem:[%s311 + $0x88] sm:$0xff]
      %v341 = vld [vmem:[%s311 + $0x90] sm:$0xff]
      %v342 = vld [vmem:[%s311 + $0x98] sm:$0xff]
      %v343 = vld [vmem:[%s311 + $0xa0] sm:$0xff]
      %v344 = vld [vmem:[%s311 + $0xa8] sm:$0xff]
      %v345 = vld [vmem:[%s311 + $0xb0] sm:$0xff]
      %v346 = vld [vmem:[%s311 + $0xb8] sm:$0xff]
      %v347 = vld [vmem:[%s311 + $0xc0] sm:$0xff]
      %v348 = vld [vmem:[%s311 + $0xc8] sm:$0xff]
      %v349 = vld [vmem:[%s311 + $0xd0] sm:$0xff]
      %v350 = vld [vmem:[%s311 + $0xd8] sm:$0xff]
      %v351 = vld [vmem:[%s311 + $0xe0] sm:$0xff]
      %v352 = vld [vmem:[%s311 + $0xe8] sm:$0xff]
      %v353 = vld [vmem:[%s311 + $0xf0] sm:$0xff]
      %v354 = vld [vmem:[%s311 + $0xf8] sm:$0xff]
      %v355 = vlaneseq
      %v356 = vand.u32 %v355, 127
      %357 = vset.pattern.permute.xlu0 0
      %358 = vperm.xlu0 %357, %v323
      %v359 = vpop.permute.xlu0 %358
      %360 = vset.pattern.permute.xlu0 0
      %361 = vperm.xlu0 %360, %v324
      %v362 = vpop.permute.xlu0 %361
      %363 = vset.pattern.permute.xlu0 0
      %364 = vperm.xlu0 %363, %v325
      %v365 = vpop.permute.xlu0 %364
      %366 = vset.pattern.permute.xlu0 0
      %367 = vperm.xlu0 %366, %v326
      %v368 = vpop.permute.xlu0 %367
      %369 = vset.pattern.permute.xlu0 0
      %370 = vperm.xlu0 %369, %v327
      %v371 = vpop.permute.xlu0 %370
      %372 = vset.pattern.permute.xlu0 0
      %373 = vperm.xlu0 %372, %v328
      %v374 = vpop.permute.xlu0 %373
      %375 = vset.pattern.permute.xlu0 0
      %376 = vperm.xlu0 %375, %v329
      %v377 = vpop.permute.xlu0 %376
      %378 = vset.pattern.permute.xlu0 0
      %379 = vperm.xlu0 %378, %v330
      %v380 = vpop.permute.xlu0 %379
      %381 = vset.pattern.permute.xlu0 0
      %382 = vperm.xlu0 %381, %v331
      %v383 = vpop.permute.xlu0 %382
      %384 = vset.pattern.permute.xlu0 0
      %385 = vperm.xlu0 %384, %v332
      %v386 = vpop.permute.xlu0 %385
      %387 = vset.pattern.permute.xlu0 0
      %388 = vperm.xlu0 %387, %v333
      %v389 = vpop.permute.xlu0 %388
      %390 = vset.pattern.permute.xlu0 0
      %391 = vperm.xlu0 %390, %v334
      %v392 = vpop.permute.xlu0 %391
      %393 = vset.pattern.permute.xlu0 0
      %394 = vperm.xlu0 %393, %v335
      %v395 = vpop.permute.xlu0 %394
      %396 = vset.pattern.permute.xlu0 0
      %397 = vperm.xlu0 %396, %v336
      %v398 = vpop.permute.xlu0 %397
      %399 = vset.pattern.permute.xlu0 0
      %400 = vperm.xlu0 %399, %v337
      %v401 = vpop.permute.xlu0 %400
      %402 = vset.pattern.permute.xlu0 0
      %403 = vperm.xlu0 %402, %v338
      %v404 = vpop.permute.xlu0 %403
      %405 = vset.pattern.permute.xlu0 0
      %406 = vperm.xlu0 %405, %v339
      %v407 = vpop.permute.xlu0 %406
      %408 = vset.pattern.permute.xlu0 0
      %409 = vperm.xlu0 %408, %v340
      %v410 = vpop.permute.xlu0 %409
      %411 = vset.pattern.permute.xlu0 0
      %412 = vperm.xlu0 %411, %v341
      %v413 = vpop.permute.xlu0 %412
      %414 = vset.pattern.permute.xlu0 0
      %415 = vperm.xlu0 %414, %v342
      %v416 = vpop.permute.xlu0 %415
      %417 = vset.pattern.permute.xlu0 0
      %418 = vperm.xlu0 %417, %v343
      %v419 = vpop.permute.xlu0 %418
      %420 = vset.pattern.permute.xlu0 0
      %421 = vperm.xlu0 %420, %v344
      %v422 = vpop.permute.xlu0 %421
      %423 = vset.pattern.permute.xlu0 0
      %424 = vperm.xlu0 %423, %v345
      %v425 = vpop.permute.xlu0 %424
      %426 = vset.pattern.permute.xlu0 0
      %427 = vperm.xlu0 %426, %v346
      %v428 = vpop.permute.xlu0 %427
      %429 = vset.pattern.permute.xlu0 0
      %430 = vperm.xlu0 %429, %v347
      %v431 = vpop.permute.xlu0 %430
      %432 = vset.pattern.permute.xlu0 0
      %433 = vperm.xlu0 %432, %v348
      %v434 = vpop.permute.xlu0 %433
      %435 = vset.pattern.permute.xlu0 0
      %436 = vperm.xlu0 %435, %v349
      %v437 = vpop.permute.xlu0 %436
      %438 = vset.pattern.permute.xlu0 0
      %439 = vperm.xlu0 %438, %v350
      %v440 = vpop.permute.xlu0 %439
      %441 = vset.pattern.permute.xlu0 0
      %442 = vperm.xlu0 %441, %v351
      %v443 = vpop.permute.xlu0 %442
      %444 = vset.pattern.permute.xlu0 0
      %445 = vperm.xlu0 %444, %v352
      %v446 = vpop.permute.xlu0 %445
      %447 = vset.pattern.permute.xlu0 0
      %448 = vperm.xlu0 %447, %v353
      %v449 = vpop.permute.xlu0 %448
      %450 = vset.pattern.permute.xlu0 0
      %451 = vperm.xlu0 %450, %v354
      %v452 = vpop.permute.xlu0 %451
      %vm453 = vcmp.eq.s32.totalorder %v359, %v356
      %vm454 = vcmp.eq.s32.totalorder %v362, %v356
      %vm455 = vcmp.eq.s32.totalorder %v365, %v356
      %vm456 = vcmp.eq.s32.totalorder %v368, %v356
      %vm457 = vcmp.eq.s32.totalorder %v371, %v356
      %vm458 = vcmp.eq.s32.totalorder %v374, %v356
      %vm459 = vcmp.eq.s32.totalorder %v377, %v356
      %vm460 = vcmp.eq.s32.totalorder %v380, %v356
      %vm461 = vcmp.eq.s32.totalorder %v383, %v356
      %vm462 = vcmp.eq.s32.totalorder %v386, %v356
      %vm463 = vcmp.eq.s32.totalorder %v389, %v356
      %vm464 = vcmp.eq.s32.totalorder %v392, %v356
      %vm465 = vcmp.eq.s32.totalorder %v395, %v356
      %vm466 = vcmp.eq.s32.totalorder %v398, %v356
      %vm467 = vcmp.eq.s32.totalorder %v401, %v356
      %vm468 = vcmp.eq.s32.totalorder %v404, %v356
      %vm469 = vcmp.eq.s32.totalorder %v407, %v356
      %vm470 = vcmp.eq.s32.totalorder %v410, %v356
      %vm471 = vcmp.eq.s32.totalorder %v413, %v356
      %vm472 = vcmp.eq.s32.totalorder %v416, %v356
      %vm473 = vcmp.eq.s32.totalorder %v419, %v356
      %vm474 = vcmp.eq.s32.totalorder %v422, %v356
      %vm475 = vcmp.eq.s32.totalorder %v425, %v356
      %vm476 = vcmp.eq.s32.totalorder %v428, %v356
      %vm477 = vcmp.eq.s32.totalorder %v431, %v356
      %vm478 = vcmp.eq.s32.totalorder %v434, %v356
      %vm479 = vcmp.eq.s32.totalorder %v437, %v356
      %vm480 = vcmp.eq.s32.totalorder %v440, %v356
      %vm481 = vcmp.eq.s32.totalorder %v443, %v356
      %vm482 = vcmp.eq.s32.totalorder %v446, %v356
      %vm483 = vcmp.eq.s32.totalorder %v449, %v356
      %vm484 = vcmp.eq.s32.totalorder %v452, %v356
      %v485 = vsel %vm453, 1, 0
      %v486 = vsel %vm454, 1, 0
      %v487 = vsel %vm455, 1, 0
      %v488 = vsel %vm456, 1, 0
      %v489 = vsel %vm457, 1, 0
      %v490 = vsel %vm458, 1, 0
      %v491 = vsel %vm459, 1, 0
      %v492 = vsel %vm460, 1, 0
      %v493 = vsel %vm461, 1, 0
      %v494 = vsel %vm462, 1, 0
      %v495 = vsel %vm463, 1, 0
      %v496 = vsel %vm464, 1, 0
      %v497 = vsel %vm465, 1, 0
      %v498 = vsel %vm466, 1, 0
      %v499 = vsel %vm467, 1, 0
      %v500 = vsel %vm468, 1, 0
      %v501 = vsel %vm469, 1, 0
      %v502 = vsel %vm470, 1, 0
      %v503 = vsel %vm471, 1, 0
      %v504 = vsel %vm472, 1, 0
      %v505 = vsel %vm473, 1, 0
      %v506 = vsel %vm474, 1, 0
      %v507 = vsel %vm475, 1, 0
      %v508 = vsel %vm476, 1, 0
      %v509 = vsel %vm477, 1, 0
      %v510 = vsel %vm478, 1, 0
      %v511 = vsel %vm479, 1, 0
      %v512 = vsel %vm480, 1, 0
      %v513 = vsel %vm481, 1, 0
      %v514 = vsel %vm482, 1, 0
      %v515 = vsel %vm483, 1, 0
      %v516 = vsel %vm484, 1, 0
      %v517 = vcvt.s32.f32 %v485
      %v518 = vcvt.s32.f32 %v486
      %v519 = vcvt.s32.f32 %v487
      %v520 = vcvt.s32.f32 %v488
      %v521 = vcvt.s32.f32 %v489
      %v522 = vcvt.s32.f32 %v490
      %v523 = vcvt.s32.f32 %v491
      %v524 = vcvt.s32.f32 %v492
      %v525 = vcvt.s32.f32 %v493
      %v526 = vcvt.s32.f32 %v494
      %v527 = vcvt.s32.f32 %v495
      %v528 = vcvt.s32.f32 %v496
      %v529 = vcvt.s32.f32 %v497
      %v530 = vcvt.s32.f32 %v498
      %v531 = vcvt.s32.f32 %v499
      %v532 = vcvt.s32.f32 %v500
      %v533 = vcvt.s32.f32 %v501
      %v534 = vcvt.s32.f32 %v502
      %v535 = vcvt.s32.f32 %v503
      %v536 = vcvt.s32.f32 %v504
      %v537 = vcvt.s32.f32 %v505
      %v538 = vcvt.s32.f32 %v506
      %v539 = vcvt.s32.f32 %v507
      %v540 = vcvt.s32.f32 %v508
      %v541 = vcvt.s32.f32 %v509
      %v542 = vcvt.s32.f32 %v510
      %v543 = vcvt.s32.f32 %v511
      %v544 = vcvt.s32.f32 %v512
      %v545 = vcvt.s32.f32 %v513
      %v546 = vcvt.s32.f32 %v514
      %v547 = vcvt.s32.f32 %v515
      %v548 = vcvt.s32.f32 %v516
      %v549 = vld [vmem:[#allocation2] sm:$0xf]
      %v550 = vld [vmem:[%s305] sm:$0xff]
      %v552 = vcombine.high %v550, %v550
      %554 = vmatprep.subr.mxu0 0.0
      %555 = vmatpush1.msra.mxu0 %v517
      %556 = vmatprep.subr.mxu0 0.0
      %557 = vmatpush1.msra.mxu0 %v518
      %558 = vmatprep.subr.mxu0 0.0
      %559 = vmatpush1.msra.mxu0 %v519
      %560 = vmatprep.subr.mxu0 0.0
      %561 = vmatpush1.msra.mxu0 %v520
      %562 = vmatprep.subr.mxu0 0.0
      %563 = vmatpush1.msra.mxu0 %v521
      %564 = vmatprep.subr.mxu0 0.0
      %565 = vmatpush1.msra.mxu0 %v522
      %566 = vmatprep.subr.mxu0 0.0
      %567 = vmatpush1.msra.mxu0 %v523
      %568 = vmatprep.subr.mxu0 0.0
      %569 = vmatpush1.msra.mxu0 %v524
      %570 = vmatprep.subr.mxu0 0.0
      %571 = vmatpush1.msra.mxu0 %v525
      %572 = vmatprep.subr.mxu0 0.0
      %573 = vmatpush1.msra.mxu0 %v526
      %574 = vmatprep.subr.mxu0 0.0
      %575 = vmatpush1.msra.mxu0 %v527
      %576 = vmatprep.subr.mxu0 0.0
      %577 = vmatpush1.msra.mxu0 %v528
      %578 = vmatprep.subr.mxu0 0.0
      %579 = vmatpush1.msra.mxu0 %v529
      %580 = vmatprep.subr.mxu0 0.0
      %581 = vmatpush1.msra.mxu0 %v530
      %582 = vmatprep.subr.mxu0 0.0
      %583 = vmatpush1.msra.mxu0 %v531
      %584 = vmatprep.subr.mxu0 0.0
      %585 = vmatpush1.msra.mxu0 %v532
      %586 = vmatprep.subr.mxu0 0.0
      %587 = vmatpush1.msra.mxu0 %v533
      %588 = vmatprep.subr.mxu0 0.0
      %589 = vmatpush1.msra.mxu0 %v534
      %590 = vmatprep.subr.mxu0 0.0
      %591 = vmatpush1.msra.mxu0 %v535
      %592 = vmatprep.subr.mxu0 0.0
      %593 = vmatpush1.msra.mxu0 %v536
      %594 = vmatprep.subr.mxu0 0.0
      %595 = vmatpush1.msra.mxu0 %v537
      %596 = vmatprep.subr.mxu0 0.0
      %597 = vmatpush1.msra.mxu0 %v538
      %598 = vmatprep.subr.mxu0 0.0
      %599 = vmatpush1.msra.mxu0 %v539
      %600 = vmatprep.subr.mxu0 0.0
      %601 = vmatpush1.msra.mxu0 %v540
      %602 = vmatprep.subr.mxu0 0.0
      %603 = vmatpush1.msra.mxu0 %v541
      %604 = vmatprep.subr.mxu0 0.0
      %605 = vmatpush1.msra.mxu0 %v542
      %606 = vmatprep.subr.mxu0 0.0
      %607 = vmatpush1.msra.mxu0 %v543
      %608 = vmatprep.subr.mxu0 0.0
      %609 = vmatpush1.msra.mxu0 %v544
      %610 = vmatprep.subr.mxu0 0.0
      %611 = vmatpush1.msra.mxu0 %v545
      %612 = vmatprep.subr.mxu0 0.0
      %613 = vmatpush1.msra.mxu0 %v546
      %614 = vmatprep.subr.mxu0 0.0
      %615 = vmatpush1.msra.mxu0 %v547
      %616 = vmatprep.subr.mxu0 0.0
      %617 = vmatpush1.msra.mxu0 %v548
      %618 = vmatprep.mubr.f32.mxu0 %v552
      %619 = vmatmul.mubr.f32.gmra.mrb[0].mxu0 %v550
      %v620 = vpop.f32.mrb[0].mxu0
      %v621 = vadd.f32 0.0, %v620
      %v622 = vpop.f32.mrb[0].mxu0
      %623 = vdwg.mxu0
      %v624 = vadd.f32 %v549, %v621
      %vm625 = vcmask 519168
      %626 = vst.msk [vmem:[#allocation2] sm:$0xf] %vm625, %v624
      // Predicated region
      $region49: #{tpu_custom_call.1} parent=43 // pred_check
        %p627 = pneg %p317
      $region50: #{tpu_custom_call.1} parent=43 // pred_check_branch
        %629 = sbr.rel (%p627) target = $region52
      $region51: #{tpu_custom_call.1} parent=43 // pred_region
        %v630 = vld [vmem:[%s296] sm:$0x7]
        %vm631 = vcmp.gt.f32.partialorder %v630, 0.0
        %v632 = vsel %vm631, 1.0, %v630
        %v633 = vld [vmem:[#allocation2] sm:$0xf]
        %vm634 = vcmask 523264
        %v636 = vsel %vm634, %v632, 0
        %v639 = vsel %vm634, %v633, 0
        %641 = vmatprep.subr.mxu0 0.0
        %642 = vmatpush1.xpose.msra.mxu0 %v639
        %643 = vmatprep.subr.mxu0 0.0
        %644 = vmatpush1.xpose.msra.mxu0 0.0
        %645 = vmatprep.subr.mxu0 0.0
        %646 = vmatpush1.xpose.msra.mxu0 0.0
        %647 = vmatprep.subr.mxu0 0.0
        %648 = vmatpush1.xpose.msra.mxu0 0.0
        %649 = vmatprep.subr.mxu0 0.0
        %650 = vmatpush1.xpose.msra.mxu0 0.0
        %651 = vmatprep.subr.mxu0 0.0
        %652 = vmatpush1.xpose.msra.mxu0 0.0
        %653 = vmatprep.subr.mxu0 0.0
        %654 = vmatpush1.xpose.msra.mxu0 0.0
        %655 = vmatprep.subr.mxu0 0.0
        %656 = vmatpush1.xpose.msra.mxu0 0.0
        %657 = vmatprep.subr.mxu0 0.0
        %658 = vmatpush1.xpose.msra.mxu0 0.0
        %659 = vmatprep.subr.mxu0 0.0
        %660 = vmatpush1.xpose.msra.mxu0 0.0
        %661 = vmatprep.subr.mxu0 0.0
        %662 = vmatpush1.xpose.msra.mxu0 0.0
        %663 = vmatprep.subr.mxu0 0.0
        %664 = vmatpush1.xpose.msra.mxu0 0.0
        %665 = vmatprep.subr.mxu0 0.0
        %666 = vmatpush1.xpose.msra.mxu0 0.0
        %667 = vmatprep.subr.mxu0 0.0
        %668 = vmatpush1.xpose.msra.mxu0 0.0
        %669 = vmatprep.subr.mxu0 0.0
        %670 = vmatpush1.xpose.msra.mxu0 0.0
        %671 = vmatprep.subr.mxu0 0.0
        %672 = vmatpush1.xpose.msra.mxu0 0.0
        %673 = vmatprep.subr.mxu0 0.0
        %674 = vmatpush1.xpose.msra.mxu0 0.0
        %675 = vmatprep.subr.mxu0 0.0
        %676 = vmatpush1.xpose.msra.mxu0 0.0
        %677 = vmatprep.subr.mxu0 0.0
        %678 = vmatpush1.xpose.msra.mxu0 0.0
        %679 = vmatprep.subr.mxu0 0.0
        %680 = vmatpush1.xpose.msra.mxu0 0.0
        %681 = vmatprep.subr.mxu0 0.0
        %682 = vmatpush1.xpose.msra.mxu0 0.0
        %683 = vmatprep.subr.mxu0 0.0
        %684 = vmatpush1.xpose.msra.mxu0 0.0
        %685 = vmatprep.subr.mxu0 0.0
        %686 = vmatpush1.xpose.msra.mxu0 0.0
        %687 = vmatprep.subr.mxu0 0.0
        %688 = vmatpush1.xpose.msra.mxu0 0.0
        %689 = vmatprep.subr.mxu0 0.0
        %690 = vmatpush1.xpose.msra.mxu0 0.0
        %691 = vmatprep.subr.mxu0 0.0
        %692 = vmatpush1.xpose.msra.mxu0 0.0
        %693 = vmatprep.subr.mxu0 0.0
        %694 = vmatpush1.xpose.msra.mxu0 0.0
        %695 = vmatprep.subr.mxu0 0.0
        %696 = vmatpush1.xpose.msra.mxu0 0.0
        %697 = vmatprep.subr.mxu0 0.0
        %698 = vmatpush1.xpose.msra.mxu0 0.0
        %699 = vmatprep.subr.mxu0 0.0
        %700 = vmatpush1.xpose.msra.mxu0 0.0
        %701 = vmatprep.subr.mxu0 0.0
        %702 = vmatpush1.xpose.msra.mxu0 0.0
        %703 = vmatprep.subr.mxu0 0.0
        %704 = vmatpush1.xpose.msra.mxu0 0.0
        %705 = vmatprep.mubr.f32.mxu0 0.0
        %706 = vmatmul.mubr.f32.gmra.mrb[0].mxu0 %v636
        %v707 = vpop.f32.mrb[0].mxu0
        %v708 = vadd.f32 0.0, %v707
        %v709 = vpop.f32.mrb[0].mxu0
        %710 = vdwg.mxu0
        %v711 = vld [vmem:[%s3] sm:$0x1]
        %v713 = vlaneseq
        %v714 = vshrl.u32 %v713, 7
        %v715 = vsub.s32 0, %v714
        %v716 = vrot.slane %v711, %v715
        %v718 = vmul.f32 %v632, %v716
        %vm719 = vcmask 518144
        %v720 = vsel %vm719, %v718, 0.0
        %721 = vadd.xlane.f32.xlu0 %v720
        %v722 = vpop.xlane.xlu0 %721
        %v723 = vadd.f32 %v722, 1e-10
        %v724 = vrcp.pop %v723
        %v725 = vmul.f32 %v708, %v724
        %v726 = vld [vmem:[%s4] sm:$0x7]
        %vm727 = vcmask 23552
        %v729 = vsel %vm727, %v726, 0
        %vm731 = vcmask 1042432
        %v733 = vsel %vm731, %v725, 0
        %735 = vmatprep.subr.mxu0 0.0
        %736 = vmatpush1.msra.mxu0 %v733
        %737 = vmatprep.subr.mxu0 0.0
        %738 = vmatpush1.msra.mxu0 0.0
        %739 = vmatprep.subr.mxu0 0.0
        %740 = vmatpush1.msra.mxu0 0.0
        %741 = vmatprep.subr.mxu0 0.0
        %742 = vmatpush1.msra.mxu0 0.0
        %743 = vmatprep.subr.mxu0 0.0
        %744 = vmatpush1.msra.mxu0 0.0
        %745 = vmatprep.subr.mxu0 0.0
        %746 = vmatpush1.msra.mxu0 0.0
        %747 = vmatprep.subr.mxu0 0.0
        %748 = vmatpush1.msra.mxu0 0.0
        %749 = vmatprep.subr.mxu0 0.0
        %750 = vmatpush1.msra.mxu0 0.0
        %751 = vmatprep.subr.mxu0 0.0
        %752 = vmatpush1.msra.mxu0 0.0
        %753 = vmatprep.subr.mxu0 0.0
        %754 = vmatpush1.msra.mxu0 0.0
        %755 = vmatprep.subr.mxu0 0.0
        %756 = vmatpush1.msra.mxu0 0.0
        %757 = vmatprep.subr.mxu0 0.0
        %758 = vmatpush1.msra.mxu0 0.0
        %759 = vmatprep.subr.mxu0 0.0
        %760 = vmatpush1.msra.mxu0 0.0
        %761 = vmatprep.subr.mxu0 0.0
        %762 = vmatpush1.msra.mxu0 0.0
        %763 = vmatprep.subr.mxu0 0.0
        %764 = vmatpush1.msra.mxu0 0.0
        %765 = vmatprep.subr.mxu0 0.0
        %766 = vmatpush1.msra.mxu0 0.0
        %767 = vmatprep.subr.mxu0 0.0
        %768 = vmatpush1.msra.mxu0 0.0
        %769 = vmatprep.subr.mxu0 0.0
        %770 = vmatpush1.msra.mxu0 0.0
        %771 = vmatprep.subr.mxu0 0.0
        %772 = vmatpush1.msra.mxu0 0.0
        %773 = vmatprep.subr.mxu0 0.0
        %774 = vmatpush1.msra.mxu0 0.0
        %775 = vmatprep.subr.mxu0 0.0
        %776 = vmatpush1.msra.mxu0 0.0
        %777 = vmatprep.subr.mxu0 0.0
        %778 = vmatpush1.msra.mxu0 0.0
        %779 = vmatprep.subr.mxu0 0.0
        %780 = vmatpush1.msra.mxu0 0.0
        %781 = vmatprep.subr.mxu0 0.0
        %782 = vmatpush1.msra.mxu0 0.0
        %783 = vmatprep.subr.mxu0 0.0
        %784 = vmatpush1.msra.mxu0 0.0
        %785 = vmatprep.subr.mxu0 0.0
        %786 = vmatpush1.msra.mxu0 0.0
        %787 = vmatprep.subr.mxu0 0.0
        %788 = vmatpush1.msra.mxu0 0.0
        %789 = vmatprep.subr.mxu0 0.0
        %790 = vmatpush1.msra.mxu0 0.0
        %791 = vmatprep.subr.mxu0 0.0
        %792 = vmatpush1.msra.mxu0 0.0
        %793 = vmatprep.subr.mxu0 0.0
        %794 = vmatpush1.msra.mxu0 0.0
        %795 = vmatprep.subr.mxu0 0.0
        %796 = vmatpush1.msra.mxu0 0.0
        %797 = vmatprep.subr.mxu0 0.0
        %798 = vmatpush1.msra.mxu0 0.0
        %799 = vmatprep.mubr.f32.mxu0 0.0
        %800 = vmatmul.mubr.f32.gmra.mrb[0].mxu0 %v729
        %v801 = vpop.f32.mrb[0].mxu0
        %v802 = vadd.f32 0.0, %v801
        %v803 = vpop.f32.mrb[0].mxu0
        %804 = vdwg.mxu0
        %v805 = vsub.f32 %v725, %v802
        %v806 = vld [vmem:[%s5] sm:$0x7]
        %v807 = vmul.f32 %v805, %v806
        %v808 = vmul.f32 %v807, %v807
        %vm809 = vcmask 26624
        %v810 = vsel %vm809, %v808, 0.0
        %811 = vadd.xlane.f32.xlu0 %v810
        %v812 = vpop.xlane.xlu0 %811
        %vm813 = vcmask 2048
        %814 = vst.msk [vmem:[%s316] sm:$0x7] %vm813, %v812
      $region52: #{tpu_custom_call.1} parent=43 // pred_fallthru
        _
      %p815 = scmp.lt.s32.totalorder %s21, 1
      %s816 = scalar_select %p815, %s21, 1
      %s817 = smul.addr %s816, 4
      %s818 = scalar_lea.vmem %s6, %s817
      // Predicated region
      $region53: #{tpu_custom_call.1} parent=43 // pred_check
        %p819 = pneg %p190
      $region54: #{tpu_custom_call.1} parent=43 // pred_check_branch
        %821 = sbr.rel (%p819) target = $region56
      $region55: #{tpu_custom_call.1} parent=43 // pred_region
        _
      $region56: #{tpu_custom_call.1} parent=43 // pred_fallthru
        _
    $region44: #{tpu_custom_call.1} parent=5 // pred_fallthru
      _
    %p822 = scmp.le.s32.totalorder 2, %s12
    // Predicated region
    $region57: #{tpu_custom_call.1} parent=5 // pred_check
      %p823 = pneg %p822
    $region58: #{tpu_custom_call.1} parent=5 // pred_check_branch
      %825 = sbr.rel (%p823) target = $region60
    $region59: #{tpu_custom_call.1} parent=5 // pred_region
      %s826 = ssub.s32 %s12, 2
      // Predicated region
      $region61: #{tpu_custom_call.1} parent=59 // pred_check
        %p827 = pneg %p196
      $region62: #{tpu_custom_call.1} parent=59 // pred_check_branch
        %829 = sbr.rel (%p827) target = $region64
      $region63: #{tpu_custom_call.1} parent=59 // pred_region
        %p830 = scmp.lt.s32.totalorder %s23, 1
        %s831 = scalar_select %p830, %s23, 1
        %s832 = smul.addr %s831, 4
        %s833 = scalar_lea.vmem %s6, %s832
      $region64: #{tpu_custom_call.1} parent=59 // pred_fallthru
        _
    $region60: #{tpu_custom_call.1} parent=5 // pred_fallthru
      _
  $region6: #{tpu_custom_call.1} parent=0 // loop_footer
    %s16 = sadd.s32 1, %s12
  $region7: #{tpu_custom_call.1} parent=0 // loop_footer_branch
    %11 = sbr.rel target = $region3
  $region8: #{tpu_custom_call.1} parent=0 // loop_exit
    _

</llo_original>
